<compile_context>
chip_gen: v7x
topology: tpu7x:2x2x1
jax: 0.10.0
libtpu: 0.0.40
codegen_flags: <defaults>
</compile_context>

<pallas_src>
import functools

import jax
import jax.numpy as jnp
from jax.experimental import pallas as pl
from jax.experimental.pallas import tpu as pltpu


def _patch_embed_kernel(patches_ref, w_ref, pos_ref, out_ref):
    # patches_ref : (TM, Kp)  bf16  row-tile of im2col patches (zero-padded K)
    # w_ref       : (Kp, E)   bf16  conv weight with BN scale folded in (resident)
    # pos_ref     : (P,  E)   f32   positions[1:P+1] + BN shift (resident)
    # out_ref     : (TM, E)   f32   TM = batches_per_tile * P
    proj = jnp.dot(patches_ref[...], w_ref[...],
                   preferred_element_type=jnp.float32)          # MXU, f32 accum
    tm, e = out_ref.shape
    p = pos_ref.shape[0]
    # View the row-tile as (images, P, E) so the resident positional block
    # broadcasts over images; pure leading-dim reshape (no relayout for P%8==0).
    proj = proj.reshape(tm // p, p, e) + pos_ref[...]
    out_ref[...] = proj.reshape(tm, e)                          # single aligned store


def _choose_batches_per_tile(b, num_p, target_rows=512):
    """Images per row-tile: ~target_rows rows, but keep >=2 grid steps when B>=2."""
    bt = max(1, min(b, max(1, target_rows // num_p)))
    if b >= 2:
        bt = min(bt, max(1, b // 2))      # >=2 "parallel" steps -> both v7x TCs busy
    if (bt * num_p) % 8 != 0:             # sublane alignment of the row tile
        bt = b                            # fall back to one full-extent block
    return bt


@functools.partial(jax.jit, static_argnames=("patch_size_x", "patch_size_y"))
def patch_embedding(x, params, *, patch_size_x, patch_size_y):
    """Forward pass of PatchEmbedding. x: (B, C, H, W) float32 -> (B, P+2, E)."""
    b, c, h, w = x.shape
    px, py = patch_size_x, patch_size_y
    ho, wo = h - px + 1, w - py + 1
    num_p = ho * wo

    weight = params["conv_w"]                                   # (E, C, px, py)
    emb = weight.shape[0]
    k_dim = c * px * py

    eps = 1e-5
    scale = params["bn_gamma"] * jax.lax.rsqrt(params["bn_var"] + eps)      # (E,)
    shift = params["bn_beta"] + (params["conv_b"] - params["bn_mean"]) * scale

    # Fold BN scale into weight columns; pad K to a multiple of 128; cast bf16.
    k_pad = k_dim + (-k_dim % 128)
    w_eff = weight.reshape(emb, k_dim).T * scale[None, :]       # (K, E)
    w_eff = jnp.pad(w_eff, ((0, k_pad - k_dim), (0, 0))).astype(jnp.bfloat16)

    # Patch extraction: one identity-kernel conv, NHWC output so (B*P, K) is a
    # pure reshape (no transpose).  K is flattened as (C, px, py), matching the
    # OIHW weight reshape above.  x is cast to bf16 first so the patches come
    # out bf16 directly (no extra astype pass over the 81x-expanded tensor).
    patches = jax.lax.conv_general_dilated_patches(
        x.astype(jnp.bfloat16), (px, py), (1, 1), "VALID",
        dimension_numbers=("NCHW", "OIHW", "NHWC"))             # (B, Ho, Wo, K)
    patches = patches.reshape(b * num_p, k_dim)                 # (M, K) bf16

    # Row tiling: whole images per tile so the resident positional block lines up.
    bt = _choose_batches_per_tile(b, num_p)
    row_tile = bt * num_p
    b_pad = pl.cdiv(b, bt) * bt
    m, m_pad = b * num_p, b_pad * num_p
    patches = jnp.pad(patches, ((0, m_pad - m), (0, k_pad - k_dim)))

    pos = params["positions"]                                   # (P+2, E) f32
    pos_eff = pos[1:num_p + 1] + shift[None, :]                 # (P, E) f32, resident

    grid = (m_pad // row_tile,)
    cost = pl.CostEstimate(
        flops=2 * m_pad * k_pad * emb,
        transcendentals=0,
        bytes_accessed=(m_pad * k_pad * 2 + k_pad * emb * 2
                        + num_p * emb * 4 + m_pad * emb * 4))

    proj = pl.pallas_call(
        _patch_embed_kernel,
        out_shape=jax.ShapeDtypeStruct((m_pad, emb), jnp.float32),
        grid=grid,
        in_specs=[
            pl.BlockSpec((row_tile, k_pad), lambda i: (i, 0)),
            pl.BlockSpec((k_pad, emb), lambda i: (0, 0)),       # VMEM-resident
            pl.BlockSpec((num_p, emb), lambda i: (0, 0)),       # VMEM-resident
        ],
        out_specs=pl.BlockSpec((row_tile, emb), lambda i: (i, 0)),
        compiler_params=pltpu.CompilerParams(
            dimension_semantics=("parallel",)),
        cost_estimate=cost,
    )(patches, w_eff, pos_eff)

    seq = proj[:m].reshape(b, num_p, emb)                       # (B, P, E)

    # cls tokens (+ their positional rows) handled once in XLA: keeps the kernel's
    # stores fully aligned; cheap while P is small (see TODO for the at-scale path).
    row_a = params["cls_token_a"].reshape(1, emb) + pos[0:1]
    row_b = params["cls_token_b"].reshape(1, emb) + pos[num_p + 1:num_p + 2]
    row_a = jnp.broadcast_to(row_a[None], (b, 1, emb))
    row_b = jnp.broadcast_to(row_b[None], (b, 1, emb))
    return jnp.concatenate([row_a, seq, row_b], axis=1)         # (B, P+2, E)


def _reference(x, params, px, py):
    """Plain-JAX f32 reference (mirrors the PyTorch forward, BN in eval mode)."""
    b = x.shape[0]
    eps = 1e-5
    conv = jax.lax.conv_general_dilated(
        x, params["conv_w"], window_strides=(1, 1), padding="VALID",
        dimension_numbers=("NCHW", "OIHW", "NCHW"))
    conv = conv + params["conv_b"][None, :, None, None]
    bn = ((conv - params["bn_mean"][None, :, None, None])
          / jnp.sqrt(params["bn_var"] + eps)[None, :, None, None]
          * params["bn_gamma"][None, :, None, None]
          + params["bn_beta"][None, :, None, None])
    e = bn.shape[1]
    seq = bn.reshape(b, e, -1).transpose(0, 2, 1)               # b (h w) e
    cls_a = jnp.broadcast_to(params["cls_token_a"], (b, 1, e))
    cls_b = jnp.broadcast_to(params["cls_token_b"], (b, 1, e))
    out = jnp.concatenate([cls_a, seq, cls_b], axis=1)
    return out + params["positions"][None]


if __name__ == "__main__":
    batch = 2
    in_channels = 4
    img_size = 16
    patch_size_x = patch_size_y = 9
    emb_size = 128
    ho = img_size - patch_size_x + 1
    wo = img_size - patch_size_y + 1
    positions_num = ho * wo + 2                                 # 66

    key = jax.random.PRNGKey(0)
    keys = jax.random.split(key, 7)
    params = {
        "conv_w": jax.random.normal(
            keys[0], (emb_size, in_channels, patch_size_x, patch_size_y),
            jnp.float32) * 0.05,
        "conv_b": jax.random.normal(keys[1], (emb_size,), jnp.float32) * 0.05,
        "bn_gamma": 1.0 + 0.1 * jax.random.normal(keys[2], (emb_size,), jnp.float32),
        "bn_beta": 0.1 * jax.random.normal(keys[3], (emb_size,), jnp.float32),
        "bn_mean": jnp.zeros((emb_size,), jnp.float32),
        "bn_var": jnp.ones((emb_size,), jnp.float32),
        "cls_token_a": jax.random.normal(keys[4], (1, 1, emb_size), jnp.float32),
        "cls_token_b": jax.random.normal(keys[5], (1, 1, emb_size), jnp.float32),
        "positions": jax.random.normal(keys[6], (positions_num, emb_size), jnp.float32),
    }

    x = jax.random.normal(jax.random.PRNGKey(42),
                          (batch, in_channels, img_size, img_size), jnp.float32)

    out = patch_embedding(x, params,
                          patch_size_x=patch_size_x, patch_size_y=patch_size_y)
    out = jax.block_until_ready(out)

    ref = _reference(x, params, patch_size_x, patch_size_y)
    assert out.shape == (batch, positions_num, emb_size), out.shape
    # Matmul inputs are bf16 (f32 accumulation); compare to the f32 reference
    # with a correspondingly relaxed tolerance.
    assert jnp.allclose(out, ref, rtol=2e-2, atol=2e-2), (
        float(jnp.max(jnp.abs(out - ref))))

    print("KERNEL_OK")
</pallas_src>

<mosaic_0001>
module attributes {stable_mosaic.version = 11 : i64} {
  func.func @_patch_embed_kernel(%arg0: i32, %arg1: memref<64x384xbf16, #tpu.memory_space<vmem>>, %arg2: memref<384x128xbf16, #tpu.memory_space<vmem>>, %arg3: memref<64x128xf32, #tpu.memory_space<vmem>>, %arg4: memref<64x128xf32, #tpu.memory_space<vmem>>) attributes {dimension_semantics = [#tpu.dimension_semantics<parallel>], iteration_bounds = array<i64: 2>, scalar_prefetch = 0 : i64, scratch_operands = 0 : i64, tpu.core_type = #tpu.core_type<tc>, window_params = [{transform_indices = @transform_0, window_bounds = array<i64: 64, 384>}, {pipeline_mode = #tpu.pipeline_mode<synchronous>, transform_indices = @transform_1, window_bounds = array<i64: 384, 128>}, {pipeline_mode = #tpu.pipeline_mode<synchronous>, transform_indices = @transform_2, window_bounds = array<i64: 64, 128>}, {transform_indices = @transform_3, window_bounds = array<i64: 64, 128>}]} {
    %c0 = arith.constant 0 : index
    %c0_0 = arith.constant 0 : index
    %0 = vector.load %arg1[%c0, %c0_0] : memref<64x384xbf16, #tpu.memory_space<vmem>>, vector<64x384xbf16>
    %c0_1 = arith.constant 0 : index
    %c0_2 = arith.constant 0 : index
    %1 = vector.load %arg2[%c0_1, %c0_2] : memref<384x128xbf16, #tpu.memory_space<vmem>>, vector<384x128xbf16>
    %cst = arith.constant dense<0.000000e+00> : vector<64x128xf32>
    %2 = tpu.matmul %0, %1, %cst {dimension_numbers = #tpu.dot_dimension_numbers<[1], [0], [0], [1], [0, 0, 1, 1], [], []>} : vector<64x384xbf16>, vector<384x128xbf16>, vector<64x128xf32> -> vector<64x128xf32>
    %3 = vector.shape_cast %2 : vector<64x128xf32> to vector<1x64x128xf32>
    %c0_3 = arith.constant 0 : index
    %c0_4 = arith.constant 0 : index
    %4 = vector.load %arg3[%c0_3, %c0_4] : memref<64x128xf32, #tpu.memory_space<vmem>>, vector<64x128xf32>
    %5 = vector.shape_cast %4 : vector<64x128xf32> to vector<1x64x128xf32>
    %6 = arith.addf %3, %5 : vector<1x64x128xf32>
    %7 = vector.shape_cast %6 : vector<1x64x128xf32> to vector<64x128xf32>
    %c0_5 = arith.constant 0 : index
    %c0_6 = arith.constant 0 : index
    %8 = vector.load %arg4[%c0_5, %c0_6] : memref<64x128xf32, #tpu.memory_space<vmem>>, vector<64x128xf32>
    tpu.vector_store %arg4[%c0_5, %c0_6], %7 {strides = array<i32>} : memref<64x128xf32, #tpu.memory_space<vmem>>, vector<64x128xf32>,
    return
  }
  func.func @transform_0(%arg0: i32) -> (i32, i32) {
    %c0_i32 = arith.constant 0 : i32
    %c0_i32_0 = arith.constant 0 : i32
    return %arg0, %c0_i32 : i32, i32
  }
  func.func @transform_1(%arg0: i32) -> (i32, i32) {
    %c0_i32 = arith.constant 0 : i32
    %c0_i32_0 = arith.constant 0 : i32
    %c0_i32_1 = arith.constant 0 : i32
    return %c0_i32, %c0_i32_0 : i32, i32
  }
  func.func @transform_2(%arg0: i32) -> (i32, i32) {
    %c0_i32 = arith.constant 0 : i32
    %c0_i32_0 = arith.constant 0 : i32
    %c0_i32_1 = arith.constant 0 : i32
    return %c0_i32, %c0_i32_0 : i32, i32
  }
  func.func @transform_3(%arg0: i32) -> (i32, i32) {
    %c0_i32 = arith.constant 0 : i32
    %c0_i32_0 = arith.constant 0 : i32
    return %arg0, %c0_i32 : i32, i32
  }
}

</mosaic_0001>

<llo_original>
// kernel: patch_embedding.1
$region0: #{patch_embedding.1}
  #allocation0 [shape = 'u32[]', space=smem, size = 0x4, offset = 0x4, fixed_abs, tag = 'smem constant byte address 0x4 - core index']
  #allocation1 [shape = 'u32[144,128]{1,0:T(1,128)}', space=vmem, size = 0x12000, scoped, tag = 'internal scratch']
  %s0 = inlined_call_operand.vmem [shape: bf16[128,384], index: 0, kind: input, shape index: {}]
  %s1 = inlined_call_operand.vmem [shape: bf16[384,128], index: 1, kind: input, shape index: {}]
  %s2 = inlined_call_operand.vmem [shape: f32[64,128], index: 2, kind: input, shape index: {}]
  %s3 = inlined_call_operand.vmem [shape: f32[128,128], index: 3, kind: output, shape index: {}]
  %s4 = sld [smem:[#allocation0]]
  $region45: #{patch_embedding.1} parent=0
    _
  %s6 = ssub.s32 1, %s4
  %s7 = scalar_select 0, %s6, %s4
  loop: start=0, step=1, limit=4
  $region2: #{patch_embedding.1} parent=0 // loop_pre_header
    _
  $region3: #{patch_embedding.1} parent=0 // loop_header
    %s9 = sphi 0, %s13
    %p10 = scmp.ge.s32.totalorder %s9, 4
    %s19 = sphi 0, %s21
    %s22 = sphi 0, %s19
    %s23 = sphi 0, %s22
    %s39 = sphi 0, %s23
    %s43 = sphi 0, %s43
    %s45 = sphi 0, %s43
    %s46 = sphi 0, %s45
    %s60 = sphi 0, %s46
    %s64 = sphi 0, %s64
    %s66 = sphi 0, %s64
    %s67 = sphi 0, %s66
    %s81 = sphi 0, %s67
    %s87 = sphi 0, %s89
    %s90 = sphi 0, %s87
    %s91 = sphi 0, %s90
    %s107 = sphi 0, %s91
  $region4: #{patch_embedding.1} parent=0 // loop_header_branch
    %12 = sbr.rel (%p10) target = $region8
  $region5: #{patch_embedding.1} parent=0 // loop_body
    %s14 = ssub.s32 %s9, 1
    %s15 = ssub.s32 %s9, 2
    %s16 = sadd.s32 %s9, 1
    %s17 = ssub.s32 %s9, %s16
    %p18 = scmp.eq.s32.totalorder %s17, 0
    %s20 = sadd.s32 %s19, 1
    %s21 = scalar_select %p18, %s19, %s20
    %p24 = pneg %p18
    %p25 = scmp.eq.s32.totalorder %s9, 1
    %p26 = por %p24, %p25
    %p27 = scmp.ne.s32.totalorder %s19, %s22
    %p28 = scmp.eq.s32.totalorder %s9, 0
    %p29 = por %p27, %p28
    %p30 = scmp.ne.s32.totalorder %s19, %s22
    %p31 = scmp.eq.s32.totalorder %s14, 1
    %p32 = por %p30, %p31
    %p33 = scmp.ne.s32.totalorder %s22, %s23
    %p34 = scmp.eq.s32.totalorder %s14, 0
    %p35 = por %p33, %p34
    %p36 = scmp.ne.s32.totalorder %s22, %s23
    %p37 = scmp.eq.s32.totalorder %s15, 1
    %p38 = por %p36, %p37
    %p40 = scmp.ne.s32.totalorder %s23, %s39
    %p41 = scmp.eq.s32.totalorder %s15, 0
    %p42 = por %p40, %p41
    %s44 = sadd.s32 %s43, 1
    %p47 = scmp.eq.s32.totalorder %s9, 1
    %p48 = scmp.ne.s32.totalorder %s43, %s45
    %p49 = scmp.eq.s32.totalorder %s9, 0
    %p50 = por %p48, %p49
    %p51 = scmp.ne.s32.totalorder %s43, %s45
    %p52 = scmp.eq.s32.totalorder %s14, 1
    %p53 = por %p51, %p52
    %p54 = scmp.ne.s32.totalorder %s45, %s46
    %p55 = scmp.eq.s32.totalorder %s14, 0
    %p56 = por %p54, %p55
    %p57 = scmp.ne.s32.totalorder %s45, %s46
    %p58 = scmp.eq.s32.totalorder %s15, 1
    %p59 = por %p57, %p58
    %p61 = scmp.ne.s32.totalorder %s46, %s60
    %p62 = scmp.eq.s32.totalorder %s15, 0
    %p63 = por %p61, %p62
    %s65 = sadd.s32 %s64, 1
    %p68 = scmp.eq.s32.totalorder %s9, 1
    %p69 = scmp.ne.s32.totalorder %s64, %s66
    %p70 = scmp.eq.s32.totalorder %s9, 0
    %p71 = por %p69, %p70
    %p72 = scmp.ne.s32.totalorder %s64, %s66
    %p73 = scmp.eq.s32.totalorder %s14, 1
    %p74 = por %p72, %p73
    %p75 = scmp.ne.s32.totalorder %s66, %s67
    %p76 = scmp.eq.s32.totalorder %s14, 0
    %p77 = por %p75, %p76
    %p78 = scmp.ne.s32.totalorder %s66, %s67
    %p79 = scmp.eq.s32.totalorder %s15, 1
    %p80 = por %p78, %p79
    %p82 = scmp.ne.s32.totalorder %s67, %s81
    %p83 = scmp.eq.s32.totalorder %s15, 0
    %p84 = por %p82, %p83
    %s85 = ssub.s32 %s9, %s16
    %p86 = scmp.eq.s32.totalorder %s85, 0
    %s88 = sadd.s32 %s87, 1
    %s89 = scalar_select %p86, %s87, %s88
    %p92 = pneg %p86
    %p93 = scmp.eq.s32.totalorder %s9, 1
    %p94 = por %p92, %p93
    %p95 = scmp.ne.s32.totalorder %s87, %s90
    %p96 = scmp.eq.s32.totalorder %s9, 0
    %p97 = por %p95, %p96
    %p98 = scmp.ne.s32.totalorder %s87, %s90
    %p99 = scmp.eq.s32.totalorder %s14, 1
    %p100 = por %p98, %p99
    %p101 = scmp.ne.s32.totalorder %s90, %s91
    %p102 = scmp.eq.s32.totalorder %s14, 0
    %p103 = por %p101, %p102
    %p104 = scmp.ne.s32.totalorder %s90, %s91
    %p105 = scmp.eq.s32.totalorder %s15, 1
    %p106 = por %p104, %p105
    %p108 = scmp.ne.s32.totalorder %s91, %s107
    %p109 = scmp.eq.s32.totalorder %s15, 0
    %p110 = por %p108, %p109
    %p111 = scmp.le.s32.totalorder 1, %s9
    %p112 = scmp.lt.s32.totalorder %s9, 3
    %p113 = pnand %p111, %p112
    %p114 = pneg %p113
    // Predicated region
    $region9: #{patch_embedding.1} parent=5 // pred_check
      _
    $region10: #{patch_embedding.1} parent=5 // pred_check_branch
      %116 = sbr.rel (%p113) target = $region12
    $region11: #{patch_embedding.1} parent=5 // pred_region
      %s117 = ssub.s32 %s9, 1
      // Predicated region
      $region13: #{patch_embedding.1} parent=11 // pred_check
        %p118 = pneg %p56
      $region14: #{patch_embedding.1} parent=11 // pred_check_branch
        %120 = sbr.rel (%p118) target = $region16
      $region15: #{patch_embedding.1} parent=11 // pred_region
        _
      $region16: #{patch_embedding.1} parent=11 // pred_fallthru
        _
      // Predicated region
      $region17: #{patch_embedding.1} parent=11 // pred_check
        %p121 = pneg %p77
      $region18: #{patch_embedding.1} parent=11 // pred_check_branch
        %123 = sbr.rel (%p121) target = $region20
      $region19: #{patch_embedding.1} parent=11 // pred_region
        _
      $region20: #{patch_embedding.1} parent=11 // pred_fallthru
        _
    $region12: #{patch_embedding.1} parent=5 // pred_fallthru
      _
    %p124 = scmp.lt.s32.totalorder %s9, 2
    // Predicated region
    $region21: #{patch_embedding.1} parent=5 // pred_check
      %p125 = pneg %p124
    $region22: #{patch_embedding.1} parent=5 // pred_check_branch
      %127 = sbr.rel (%p125) target = $region24
    $region23: #{patch_embedding.1} parent=5 // pred_region
      // Predicated region
      $region25: #{patch_embedding.1} parent=23 // pred_check
        %p128 = pneg %p29
      $region26: #{patch_embedding.1} parent=23 // pred_check_branch
        %130 = sbr.rel (%p128) target = $region28
      $region27: #{patch_embedding.1} parent=23 // pred_region
        %s131 = smul.u32 8, %s9
        %p132 = scmp.lt.s32.totalorder %s131, 15
        %s133 = scalar_select %p132, %s131, 15
        %s134 = smul.addr %s133, 3
        %s135 = smul.addr %s134, 4
        %s136 = scalar_lea.vmem %s0, %s135
        %s137 = smul.u32 8, %s9
      $region28: #{patch_embedding.1} parent=23 // pred_fallthru
        _
    $region24: #{patch_embedding.1} parent=5 // pred_fallthru
      _
    %p138 = scmp.le.s32.totalorder 1, %s9
    %p139 = scmp.lt.s32.totalorder %s9, 3
    %p140 = pnand %p138, %p139
    %p141 = pneg %p140
    // Predicated region
    $region29: #{patch_embedding.1} parent=5 // pred_check
      _
    $region30: #{patch_embedding.1} parent=5 // pred_check_branch
      %143 = sbr.rel (%p140) target = $region32
    $region31: #{patch_embedding.1} parent=5 // pred_region
      %s144 = ssub.s32 %s9, 1
      %s145 = smul.u32 8, %s14
      %p146 = scmp.lt.s32.totalorder %s145, 15
      %s147 = scalar_select %p146, %s145, 15
      %s148 = smul.addr %s147, 3
      %s149 = smul.addr %s148, 4
      %s150 = scalar_lea.vmem %s0, %s149
      %p151 = pneg %p35
      %p152 = pneg %p32
      %p153 = pneg %p56
      %p154 = pneg %p53
      %p155 = pneg %p77
      %p156 = pneg %p74
      %p157 = pneg %p103
      %p158 = pneg %p100
      %s159 = smul.u32 8, %s14
      %p160 = scmp.lt.s32.totalorder %s159, 15
      %s161 = scalar_select %p160, %s159, 15
      %s162 = smul.addr %s161, 8
      %s163 = scalar_lea.vmem %s3, %s162
      %s164 = smul.u32 8, %s14
      %p165 = scmp.lt.s32.totalorder %s164, 15
      %s166 = scalar_select %p165, %s164, 15
      %s167 = smul.addr %s166, 3
      %s168 = smul.addr %s167, 4
      %s169 = scalar_lea.vmem %s0, %s168
      %s170 = smul.u32 8, %s14
      %s171 = smul.u32 8, %s14
      %p172 = scmp.lt.s32.totalorder %s171, 15
      %s173 = scalar_select %p172, %s171, 15
      %s174 = smul.addr %s173, 8
      %s175 = scalar_lea.vmem %s3, %s174
      %s176 = smul.u32 8, %s14
      %v178 = vld [vmem:[%s169] sm:$0xff]
      %v179 = vld [vmem:[%s169 + $0x8] sm:$0xf]
      %v180 = vld [vmem:[%s169 + $0xc] sm:$0xff]
      %v181 = vld [vmem:[%s169 + $0x14] sm:$0xf]
      %v182 = vld [vmem:[%s169 + $0x18] sm:$0xff]
      %v183 = vld [vmem:[%s169 + $0x20] sm:$0xf]
      %v184 = vld [vmem:[%s169 + $0x24] sm:$0xff]
      %v185 = vld [vmem:[%s169 + $0x2c] sm:$0xf]
      %v186 = vld [vmem:[%s169 + $0x30] sm:$0xff]
      %v187 = vld [vmem:[%s169 + $0x38] sm:$0xf]
      %v188 = vld [vmem:[%s169 + $0x3c] sm:$0xff]
      %v189 = vld [vmem:[%s169 + $0x44] sm:$0xf]
      %v190 = vld [vmem:[%s169 + $0x48] sm:$0xff]
      %v191 = vld [vmem:[%s169 + $0x50] sm:$0xf]
      %v192 = vld [vmem:[%s169 + $0x54] sm:$0xff]
      %v193 = vld [vmem:[%s169 + $0x5c] sm:$0xf]
      %v194 = vld [vmem:[%s1] sm:$0xf]
      %v195 = vld [vmem:[%s1 + $0x4] sm:$0xf]
      %v196 = vld [vmem:[%s1 + $0x8] sm:$0xf]
      %v197 = vld [vmem:[%s1 + $0xc] sm:$0xf]
      %v198 = vld [vmem:[%s1 + $0x10] sm:$0xf]
      %v199 = vld [vmem:[%s1 + $0x14] sm:$0xf]
      %v200 = vld [vmem:[%s1 + $0x18] sm:$0xf]
      %v201 = vld [vmem:[%s1 + $0x1c] sm:$0xf]
      %v202 = vld [vmem:[%s1 + $0x20] sm:$0xf]
      %v203 = vld [vmem:[%s1 + $0x24] sm:$0xf]
      %v204 = vld [vmem:[%s1 + $0x28] sm:$0xf]
      %v205 = vld [vmem:[%s1 + $0x2c] sm:$0xf]
      %v206 = vld [vmem:[%s1 + $0x30] sm:$0xf]
      %v207 = vld [vmem:[%s1 + $0x34] sm:$0xf]
      %v208 = vld [vmem:[%s1 + $0x38] sm:$0xf]
      %v209 = vld [vmem:[%s1 + $0x3c] sm:$0xf]
      %v210 = vld [vmem:[%s1 + $0x40] sm:$0xf]
      %v211 = vld [vmem:[%s1 + $0x44] sm:$0xf]
      %v212 = vld [vmem:[%s1 + $0x48] sm:$0xf]
      %v213 = vld [vmem:[%s1 + $0x4c] sm:$0xf]
      %v214 = vld [vmem:[%s1 + $0x50] sm:$0xf]
      %v215 = vld [vmem:[%s1 + $0x54] sm:$0xf]
      %v216 = vld [vmem:[%s1 + $0x58] sm:$0xf]
      %v217 = vld [vmem:[%s1 + $0x5c] sm:$0xf]
      %v218 = vld [vmem:[%s1 + $0x60] sm:$0xf]
      %v219 = vld [vmem:[%s1 + $0x64] sm:$0xf]
      %v220 = vld [vmem:[%s1 + $0x68] sm:$0xf]
      %v221 = vld [vmem:[%s1 + $0x6c] sm:$0xf]
      %v222 = vld [vmem:[%s1 + $0x70] sm:$0xf]
      %v223 = vld [vmem:[%s1 + $0x74] sm:$0xf]
      %v224 = vld [vmem:[%s1 + $0x78] sm:$0xf]
      %v225 = vld [vmem:[%s1 + $0x7c] sm:$0xf]
      %v226 = vld [vmem:[%s1 + $0x80] sm:$0xf]
      %v227 = vld [vmem:[%s1 + $0x84] sm:$0xf]
      %v228 = vld [vmem:[%s1 + $0x88] sm:$0xf]
      %v229 = vld [vmem:[%s1 + $0x8c] sm:$0xf]
      %v230 = vld [vmem:[%s1 + $0x90] sm:$0xf]
      %v231 = vld [vmem:[%s1 + $0x94] sm:$0xf]
      %v232 = vld [vmem:[%s1 + $0x98] sm:$0xf]
      %v233 = vld [vmem:[%s1 + $0x9c] sm:$0xf]
      %v234 = vld [vmem:[%s1 + $0xa0] sm:$0xf]
      %v235 = vld [vmem:[%s1 + $0xa4] sm:$0xf]
      %v236 = vld [vmem:[%s1 + $0xa8] sm:$0xf]
      %v237 = vld [vmem:[%s1 + $0xac] sm:$0xf]
      %v238 = vld [vmem:[%s1 + $0xb0] sm:$0xf]
      %v239 = vld [vmem:[%s1 + $0xb4] sm:$0xf]
      %v240 = vld [vmem:[%s1 + $0xb8] sm:$0xf]
      %v241 = vld [vmem:[%s1 + $0xbc] sm:$0xf]
      %v258 = vunpack.c.l.b16 %v178
      %v259 = vunpack.c.h.b16 %v178
      %v260 = vunpack.c.l.b16 %v179
      %v261 = vunpack.c.l.b16 %v180
      %v262 = vunpack.c.h.b16 %v180
      %v263 = vunpack.c.l.b16 %v181
      %v264 = vunpack.c.l.b16 %v182
      %v265 = vunpack.c.h.b16 %v182
      %v266 = vunpack.c.l.b16 %v183
      %v267 = vunpack.c.l.b16 %v184
      %v268 = vunpack.c.h.b16 %v184
      %v269 = vunpack.c.l.b16 %v185
      %v270 = vunpack.c.l.b16 %v186
      %v271 = vunpack.c.h.b16 %v186
      %v272 = vunpack.c.l.b16 %v187
      %v273 = vunpack.c.l.b16 %v188
      %v274 = vunpack.c.h.b16 %v188
      %v275 = vunpack.c.l.b16 %v189
      %v276 = vunpack.c.l.b16 %v190
      %v277 = vunpack.c.h.b16 %v190
      %v278 = vunpack.c.l.b16 %v191
      %v279 = vunpack.c.l.b16 %v192
      %v280 = vunpack.c.h.b16 %v192
      %v281 = vunpack.c.l.b16 %v193
      %v282 = vpack.c.b16 %v261, %v258
      %v283 = vpack.c.b16 %v262, %v259
      %v284 = vpack.c.b16 %v263, %v260
      %v285 = vpack.c.b16 %v267, %v264
      %v286 = vpack.c.b16 %v268, %v265
      %v287 = vpack.c.b16 %v269, %v266
      %v288 = vpack.c.b16 %v273, %v270
      %v289 = vpack.c.b16 %v274, %v271
      %v290 = vpack.c.b16 %v275, %v272
      %v291 = vpack.c.b16 %v279, %v276
      %v292 = vpack.c.b16 %v280, %v277
      %v293 = vpack.c.b16 %v281, %v278
      %v354 = vunpack.c.l.b16 %v194
      %v355 = vunpack.c.l.b16 %v195
      %v356 = vunpack.c.l.b16 %v196
      %v357 = vunpack.c.l.b16 %v197
      %v358 = vunpack.c.l.b16 %v198
      %v359 = vunpack.c.l.b16 %v199
      %v360 = vunpack.c.l.b16 %v200
      %v361 = vunpack.c.l.b16 %v201
      %v362 = vunpack.c.l.b16 %v202
      %v363 = vunpack.c.l.b16 %v203
      %v364 = vunpack.c.l.b16 %v204
      %v365 = vunpack.c.l.b16 %v205
      %v366 = vunpack.c.l.b16 %v206
      %v367 = vunpack.c.l.b16 %v207
      %v368 = vunpack.c.l.b16 %v208
      %v369 = vunpack.c.l.b16 %v209
      %v370 = vunpack.c.l.b16 %v210
      %v371 = vunpack.c.l.b16 %v211
      %v372 = vunpack.c.l.b16 %v212
      %v373 = vunpack.c.l.b16 %v213
      %v374 = vunpack.c.l.b16 %v214
      %v375 = vunpack.c.l.b16 %v215
      %v376 = vunpack.c.l.b16 %v216
      %v377 = vunpack.c.l.b16 %v217
      %v378 = vunpack.c.l.b16 %v218
      %v379 = vunpack.c.l.b16 %v219
      %v380 = vunpack.c.l.b16 %v220
      %v381 = vunpack.c.l.b16 %v221
      %v382 = vunpack.c.l.b16 %v222
      %v383 = vunpack.c.l.b16 %v223
      %v384 = vunpack.c.l.b16 %v224
      %v385 = vunpack.c.l.b16 %v225
      %v386 = vunpack.c.l.b16 %v226
      %v387 = vunpack.c.l.b16 %v227
      %v388 = vunpack.c.l.b16 %v228
      %v389 = vunpack.c.l.b16 %v229
      %v390 = vunpack.c.l.b16 %v230
      %v391 = vunpack.c.l.b16 %v231
      %v392 = vunpack.c.l.b16 %v232
      %v393 = vunpack.c.l.b16 %v233
      %v394 = vunpack.c.l.b16 %v234
      %v395 = vunpack.c.l.b16 %v235
      %v396 = vunpack.c.l.b16 %v236
      %v397 = vunpack.c.l.b16 %v237
      %v398 = vunpack.c.l.b16 %v238
      %v399 = vunpack.c.l.b16 %v239
      %v400 = vunpack.c.l.b16 %v240
      %v401 = vunpack.c.l.b16 %v241
      %v402 = vpack.c.b16 %v355, %v354
      %v403 = vpack.c.b16 %v357, %v356
      %v404 = vpack.c.b16 %v359, %v358
      %v405 = vpack.c.b16 %v361, %v360
      %v406 = vpack.c.b16 %v363, %v362
      %v407 = vpack.c.b16 %v365, %v364
      %v408 = vpack.c.b16 %v367, %v366
      %v409 = vpack.c.b16 %v369, %v368
      %v410 = vpack.c.b16 %v371, %v370
      %v411 = vpack.c.b16 %v373, %v372
      %v412 = vpack.c.b16 %v375, %v374
      %v413 = vpack.c.b16 %v377, %v376
      %v414 = vpack.c.b16 %v379, %v378
      %v415 = vpack.c.b16 %v381, %v380
      %v416 = vpack.c.b16 %v383, %v382
      %v417 = vpack.c.b16 %v385, %v384
      %v418 = vpack.c.b16 %v387, %v386
      %v419 = vpack.c.b16 %v389, %v388
      %v420 = vpack.c.b16 %v391, %v390
      %v421 = vpack.c.b16 %v393, %v392
      %v422 = vpack.c.b16 %v395, %v394
      %v423 = vpack.c.b16 %v397, %v396
      %v424 = vpack.c.b16 %v399, %v398
      %v425 = vpack.c.b16 %v401, %v400
      %450 = vmatprep.subr.bf16.mxu0 0
      %451 = vmatpush1.bf16.msra.mxu0 %v402
      %452 = vmatprep.subr.bf16.mxu0 0
      %453 = vmatpush1.bf16.msra.mxu0 %v403
      %454 = vmatprep.subr.bf16.mxu0 0
      %455 = vmatpush1.bf16.msra.mxu0 %v404
      %456 = vmatprep.subr.bf16.mxu0 0
      %457 = vmatpush1.bf16.msra.mxu0 %v405
      %458 = vmatprep.subr.bf16.mxu0 0
      %459 = vmatpush1.bf16.msra.mxu0 %v406
      %460 = vmatprep.subr.bf16.mxu0 0
      %461 = vmatpush1.bf16.msra.mxu0 %v407
      %462 = vmatprep.subr.bf16.mxu0 0
      %463 = vmatpush1.bf16.msra.mxu0 %v408
      %464 = vmatprep.subr.bf16.mxu0 0
      %465 = vmatpush1.bf16.msra.mxu0 %v409
      %466 = vmatprep.subr.bf16.mxu0 0
      %467 = vmatpush1.bf16.msra.mxu0 %v410
      %468 = vmatprep.subr.bf16.mxu0 0
      %469 = vmatpush1.bf16.msra.mxu0 %v411
      %470 = vmatprep.subr.bf16.mxu0 0
      %471 = vmatpush1.bf16.msra.mxu0 %v412
      %472 = vmatprep.subr.bf16.mxu0 0
      %473 = vmatpush1.bf16.msra.mxu0 %v413
      %474 = vmatprep.subr.bf16.mxu0 0
      %475 = vmatpush1.bf16.msra.mxu0 %v414
      %476 = vmatprep.subr.bf16.mxu0 0
      %477 = vmatpush1.bf16.msra.mxu0 %v415
      %478 = vmatprep.subr.bf16.mxu0 0
      %479 = vmatpush1.bf16.msra.mxu0 %v416
      %480 = vmatprep.subr.bf16.mxu0 0
      %481 = vmatpush1.bf16.msra.mxu0 %v417
      %482 = vmatprep.mubr.bf16.mxu0 %v283
      %483 = vmatmul.mubr.bf16.gmra.mrb[0].mxu0 %v282
      %v484 = vpop.f32.mrb[0].mxu0
      %v485 = vadd.f32 0.0, %v484
      %v486 = vpop.f32.mrb[0].mxu0
      %v487 = vpop.f32.mrb[0].mxu0
      %v488 = vadd.f32 0.0, %v487
      %v489 = vpop.f32.mrb[0].mxu0
      %490 = vmatprep.mubr.bf16.mxu0 %v286
      %491 = vmatmul.mubr.bf16.gmra.mrb[0].mxu0 %v285
      %v492 = vpop.f32.mrb[0].mxu0
      %v493 = vadd.f32 0.0, %v492
      %v494 = vpop.f32.mrb[0].mxu0
      %v495 = vpop.f32.mrb[0].mxu0
      %v496 = vadd.f32 0.0, %v495
      %v497 = vpop.f32.mrb[0].mxu0
      %498 = vmatprep.mubr.bf16.mxu0 %v289
      %499 = vmatmul.mubr.bf16.gmra.mrb[0].mxu0 %v288
      %v500 = vpop.f32.mrb[0].mxu0
      %v501 = vadd.f32 0.0, %v500
      %v502 = vpop.f32.mrb[0].mxu0
      %v503 = vpop.f32.mrb[0].mxu0
      %v504 = vadd.f32 0.0, %v503
      %v505 = vpop.f32.mrb[0].mxu0
      %506 = vmatprep.mubr.bf16.mxu0 %v292
      %507 = vmatmul.mubr.bf16.gmra.mrb[0].mxu0 %v291
      %v508 = vpop.f32.mrb[0].mxu0
      %v509 = vadd.f32 0.0, %v508
      %v510 = vpop.f32.mrb[0].mxu0
      %v511 = vpop.f32.mrb[0].mxu0
      %v512 = vadd.f32 0.0, %v511
      %v513 = vpop.f32.mrb[0].mxu0
      %514 = vdwg.mxu0
      %515 = vmatprep.subr.bf16.mxu0 0
      %516 = vmatpush1.bf16.msra.mxu0 %v418
      %517 = vmatprep.subr.bf16.mxu0 0
      %518 = vmatpush1.bf16.msra.mxu0 %v419
      %519 = vmatprep.subr.bf16.mxu0 0
      %520 = vmatpush1.bf16.msra.mxu0 %v420
      %521 = vmatprep.subr.bf16.mxu0 0
      %522 = vmatpush1.bf16.msra.mxu0 %v421
      %523 = vmatprep.subr.bf16.mxu0 0
      %524 = vmatpush1.bf16.msra.mxu0 %v422
      %525 = vmatprep.subr.bf16.mxu0 0
      %526 = vmatpush1.bf16.msra.mxu0 %v423
      %527 = vmatprep.subr.bf16.mxu0 0
      %528 = vmatpush1.bf16.msra.mxu0 %v424
      %529 = vmatprep.subr.bf16.mxu0 0
      %530 = vmatpush1.bf16.msra.mxu0 %v425
      %531 = vmatprep.subr.bf16.mxu0 0
      %532 = vmatpush1.bf16.msra.mxu0 0
      %533 = vmatprep.subr.bf16.mxu0 0
      %534 = vmatpush1.bf16.msra.mxu0 0
      %535 = vmatprep.subr.bf16.mxu0 0
      %536 = vmatpush1.bf16.msra.mxu0 0
      %537 = vmatprep.subr.bf16.mxu0 0
      %538 = vmatpush1.bf16.msra.mxu0 0
      %539 = vmatprep.subr.bf16.mxu0 0
      %540 = vmatpush1.bf16.msra.mxu0 0
      %541 = vmatprep.subr.bf16.mxu0 0
      %542 = vmatpush1.bf16.msra.mxu0 0
      %543 = vmatprep.subr.bf16.mxu0 0
      %544 = vmatpush1.bf16.msra.mxu0 0
      %545 = vmatprep.subr.bf16.mxu0 0
      %546 = vmatpush1.bf16.msra.mxu0 0
      %547 = vmatprep.mubr.bf16.mxu0 0
      %548 = vmatmul.mubr.bf16.gmra.mrb[0].mxu0 %v284
      %v549 = vpop.f32.mrb[0].mxu0
      %v550 = vadd.f32 %v485, %v549
      %v551 = vpop.f32.mrb[0].mxu0
      %v552 = vpop.f32.mrb[0].mxu0
      %v553 = vadd.f32 %v488, %v552
      %v554 = vpop.f32.mrb[0].mxu0
      %555 = vmatprep.mubr.bf16.mxu0 0
      %556 = vmatmul.mubr.bf16.gmra.mrb[0].mxu0 %v287
      %v557 = vpop.f32.mrb[0].mxu0
      %v558 = vadd.f32 %v493, %v557
      %v559 = vpop.f32.mrb[0].mxu0
      %v560 = vpop.f32.mrb[0].mxu0
      %v561 = vadd.f32 %v496, %v560
      %v562 = vpop.f32.mrb[0].mxu0
      %563 = vmatprep.mubr.bf16.mxu0 0
      %564 = vmatmul.mubr.bf16.gmra.mrb[0].mxu0 %v290
      %v565 = vpop.f32.mrb[0].mxu0
      %v566 = vadd.f32 %v501, %v565
      %v567 = vpop.f32.mrb[0].mxu0
      %v568 = vpop.f32.mrb[0].mxu0
      %v569 = vadd.f32 %v504, %v568
      %v570 = vpop.f32.mrb[0].mxu0
      %571 = vmatprep.mubr.bf16.mxu0 0
      %572 = vmatmul.mubr.bf16.gmra.mrb[0].mxu0 %v293
      %v573 = vpop.f32.mrb[0].mxu0
      %v574 = vadd.f32 %v509, %v573
      %v575 = vpop.f32.mrb[0].mxu0
      %v576 = vpop.f32.mrb[0].mxu0
      %v577 = vadd.f32 %v512, %v576
      %v578 = vpop.f32.mrb[0].mxu0
      %579 = vdwg.mxu0
      %v580 = vld [vmem:[%s2] sm:$0xff]
      %v581 = vld [vmem:[%s2 + $0x8] sm:$0xff]
      %v582 = vld [vmem:[%s2 + $0x10] sm:$0xff]
      %v583 = vld [vmem:[%s2 + $0x18] sm:$0xff]
      %v584 = vld [vmem:[%s2 + $0x20] sm:$0xff]
      %v585 = vld [vmem:[%s2 + $0x28] sm:$0xff]
      %v586 = vld [vmem:[%s2 + $0x30] sm:$0xff]
      %v587 = vld [vmem:[%s2 + $0x38] sm:$0xff]
      %v588 = vadd.f32 %v550, %v580
      %v589 = vadd.f32 %v553, %v581
      %v590 = vadd.f32 %v558, %v582
      %v591 = vadd.f32 %v561, %v583
      %v592 = vadd.f32 %v566, %v584
      %v593 = vadd.f32 %v569, %v585
      %v594 = vadd.f32 %v574, %v586
      %v595 = vadd.f32 %v577, %v587
      %596 = vst [vmem:[%s175] sm:$0xff] %v588
      %597 = vst [vmem:[%s175 + $0x8] sm:$0xff] %v589
      %598 = vst [vmem:[%s175 + $0x10] sm:$0xff] %v590
      %599 = vst [vmem:[%s175 + $0x18] sm:$0xff] %v591
      %600 = vst [vmem:[%s175 + $0x20] sm:$0xff] %v592
      %601 = vst [vmem:[%s175 + $0x28] sm:$0xff] %v593
      %602 = vst [vmem:[%s175 + $0x30] sm:$0xff] %v594
      %603 = vst [vmem:[%s175 + $0x38] sm:$0xff] %v595
      %s604 = smul.u32 8, %s14
      %p605 = scmp.lt.s32.totalorder %s604, 15
      %s606 = scalar_select %p605, %s604, 15
      %s607 = smul.addr %s606, 8
      %s608 = scalar_lea.vmem %s3, %s607
      // Predicated region
      $region33: #{patch_embedding.1} parent=31 // pred_check
        %p609 = pneg %p100
      $region34: #{patch_embedding.1} parent=31 // pred_check_branch
        %611 = sbr.rel (%p609) target = $region36
      $region35: #{patch_embedding.1} parent=31 // pred_region
        %s612 = smul.u32 8, %s14
      $region36: #{patch_embedding.1} parent=31 // pred_fallthru
        _
    $region32: #{patch_embedding.1} parent=5 // pred_fallthru
      _
    %p613 = scmp.le.s32.totalorder 2, %s9
    // Predicated region
    $region37: #{patch_embedding.1} parent=5 // pred_check
      %p614 = pneg %p613
    $region38: #{patch_embedding.1} parent=5 // pred_check_branch
      %616 = sbr.rel (%p614) target = $region40
    $region39: #{patch_embedding.1} parent=5 // pred_region
      %s617 = ssub.s32 %s9, 2
      // Predicated region
      $region41: #{patch_embedding.1} parent=39 // pred_check
        %p618 = pneg %p106
      $region42: #{patch_embedding.1} parent=39 // pred_check_branch
        %620 = sbr.rel (%p618) target = $region44
      $region43: #{patch_embedding.1} parent=39 // pred_region
        %s621 = smul.u32 8, %s15
        %p622 = scmp.lt.s32.totalorder %s621, 15
        %s623 = scalar_select %p622, %s621, 15
        %s624 = smul.addr %s623, 8
        %s625 = scalar_lea.vmem %s3, %s624
      $region44: #{patch_embedding.1} parent=39 // pred_fallthru
        _
    $region40: #{patch_embedding.1} parent=5 // pred_fallthru
      _
  $region6: #{patch_embedding.1} parent=0 // loop_footer
    %s13 = sadd.s32 1, %s9
  $region7: #{patch_embedding.1} parent=0 // loop_footer_branch
    %8 = sbr.rel target = $region3
  $region8: #{patch_embedding.1} parent=0 // loop_exit
    _

</llo_original>
